<compile_context>
chip_gen: v6e
topology: v6e:2x2x1
jax: 0.10.0
libtpu: 0.0.40
codegen_flags: <defaults>
</compile_context>

<pallas_src>
import jax
import jax.numpy as jnp
from jax import lax
from jax.experimental import pallas as pl
from jax.experimental.pallas import tpu as pltpu

# ------------------------- module hyper-parameters ---------------------------
HIDDEN = 32          # hidden_dim (kept small per instructions)
N_ACTIONS = 6        # len(BASE_ACTIONS)      -- synthetic stand-in for the repo constant
N_TYPES = 5          # len(BASE_LINE_TYPES)   -- synthetic stand-in for the repo constant
K = 5                # components_size of the MixtureDensityLayer
EPSILON = 1e-4
BOUNDS = (0.0, 1.0)  # NOTE: original code unpacks this as (upper, lower) -- reproduced exactly
BASE_TYPE_COEF = 1.0
ARG_COEF = 1.0
LOG_SQRT_2PI = 0.39908993417   # constant copied verbatim from the original torch code

# --------------------- packed weight-slab layout (host side) ------------------
# rows of the (K_PAD, N_PAD) slab = augmented input features
ROW_H = 0                          # lstm hidden                rows [0, 32)
ROW_A = ROW_H + HIDDEN             # onehot(base_idx)           rows [32, 38)
ROW_T = ROW_A + N_ACTIONS          # onehot(base_type)          rows [38, 43)
ROW_G = ROW_T + N_TYPES            # target_args0 scalar        row  43
ROW_ONE = ROW_G + 1                # constant-1 lane -> bias    row  44
K_PAD = 48                         # padded to a sublane multiple (rows 45..47 zero)
AUX_W = K_PAD - HIDDEN             # 16 lanes of "aux" features appended to x
IDX_ARG0 = N_ACTIONS + N_TYPES     # aux lane 11 holds target_args0
IDX_ONE = IDX_ARG0 + 1             # aux lane 12 is the constant-1 (bias) lane

# columns of the slab = concatenated head outputs
COL_A = 0                          # base-action logits         cols [0, 6)
COL_T = COL_A + N_ACTIONS          # base-type  logits          cols [6, 11)
COL_UVP0 = COL_T + N_TYPES         # MD head 0 (u|v|p logits)   cols [11, 26)
COL_UVP1 = COL_UVP0 + 3 * K        # MD head 1 (u|v|p logits)   cols [26, 41)
N_USED = COL_UVP1 + 3 * K          # 41 used columns
N_PAD = 128                        # lane-dense slab width

# ------------------------ output-slab layout -----------------------------------
O_LOSS, O_ACC_IDX, O_ACC_TYPE = 0, 1, 2
O_MD0 = 3                          # u0|v0|p0  -> cols [3, 18)
O_MD1 = O_MD0 + 3 * K              # u1|v1|p1  -> cols [18, 33)
O_USED = O_MD1 + 3 * K             # 33 used lanes
OUT_W = 64                         # f32 slab; only 33/64 lanes used (halves HBM writeback
                                   # vs the previous 128-wide slab)


# ------------------------------ kernel helpers --------------------------------
def _lse(x):
    """logsumexp over the last axis; also returns the max so callers can reuse it."""
    m = jnp.max(x, axis=-1, keepdims=True)
    return m + jnp.log(jnp.sum(jnp.exp(x - m), axis=-1, keepdims=True)), m


def _first_argmax(x, maxv, n):
    """First-occurrence argmax along the last axis (reuses a precomputed max)."""
    b = x.shape[0]
    iota = lax.broadcasted_iota(jnp.int32, (b, n), 1)
    return jnp.min(jnp.where(x == maxv, iota, n), axis=-1, keepdims=True)


def _sigmoid(x):
    return 1.0 / (1.0 + jnp.exp(-x))


def _softplus(x):
    return jnp.maximum(x, 0.0) + jnp.log(1.0 + jnp.exp(-jnp.abs(x)))


def _md_block(uvp):
    """MixtureDensityLayer head: (B, 3K) raw logits -> (B, 3K) block [u | v | log_softmax p]."""
    b = uvp.shape[0]
    upper, lower = BOUNDS            # NOTE: original code unpacks (upper, lower) -- reproduced
    u_all = (upper - lower) * _sigmoid(uvp) + lower
    v_all = _softplus(uvp) + EPSILON
    lse_p, _ = _lse(uvp[:, 2 * K:3 * K])
    p_all = uvp - lse_p
    lane = lax.broadcasted_iota(jnp.int32, (b, 3 * K), 1)
    return jnp.where(lane < K, u_all, jnp.where(lane < 2 * K, v_all, p_all))


def _md_nll(md, target):
    """Negative mixture-density log-likelihood from an (B, 3K) [u|v|p] block."""
    u = md[:, 0:K]
    v = md[:, K:2 * K]
    p = md[:, 2 * K:3 * K]
    d = u - target
    ll = -d * d / (2.0 * v) - 0.5 * jnp.log(v) + p - LOG_SQRT_2PI
    return -_lse(ll)[0]


# --------------------------------- kernel -------------------------------------
def _decoder_kernel(x_ref, tgt_ref, w_ref, out_ref):
    x = x_ref[...]                        # (Bb, HIDDEN) f32
    tgt = tgt_ref[...]                    # (Bb, 4)      f32
    b = x.shape[0]

    t_idx = tgt[:, 0:1].astype(jnp.int32)     # (Bb, 1)
    t_type = tgt[:, 1:2].astype(jnp.int32)    # (Bb, 1)
    a0 = tgt[:, 2:3]                          # (Bb, 1)
    a1 = tgt[:, 3:4]                          # (Bb, 1)

    # aux feature block built on the VPU (no one-hot matmuls):
    #   lanes [0,6) = onehot(base_idx), [6,11) = onehot(base_type),
    #   lane 11 = target_args0, lane 12 = 1.0 (folds the bias into the MXU pass), rest 0
    lane_aux = lax.broadcasted_iota(jnp.int32, (b, AUX_W), 1)
    aux = jnp.logical_or(lane_aux == t_idx,
                         lane_aux == t_type + N_ACTIONS).astype(jnp.float32)
    aux = aux + jnp.where(lane_aux == IDX_ARG0, a0, 0.0)
    aux = aux + (lane_aux == IDX_ONE).astype(jnp.float32)
    oh_idx = aux[:, 0:N_ACTIONS]
    oh_type = aux[:, N_ACTIONS:N_ACTIONS + N_TYPES]

    # all 8 Linear layers + their biases fused into ONE MXU pass against the (48, 128) slab
    aug = jnp.concatenate([x, aux], axis=-1)                          # (Bb, 48)
    z = jnp.dot(aug, w_ref[...], preferred_element_type=jnp.float32)  # (Bb, 128)

    logits_a = z[:, COL_A:COL_A + N_ACTIONS]
    logits_t = z[:, COL_T:COL_T + N_TYPES]

    # ---- cross entropies + accuracies (max computed once per head, reused) ----
    lse_a, max_a = _lse(logits_a)
    loss_idx = lse_a - jnp.sum(logits_a * oh_idx, axis=-1, keepdims=True)
    acc_idx = (_first_argmax(logits_a, max_a, N_ACTIONS) == t_idx).astype(jnp.float32)

    lse_t, max_t = _lse(logits_t)
    loss_type = lse_t - jnp.sum(logits_t * oh_type, axis=-1, keepdims=True)
    acc_type = (_first_argmax(logits_t, max_t, N_TYPES) == t_type).astype(jnp.float32)

    # ---- MixtureDensity heads + negative log-likelihood losses ----------------
    md0 = _md_block(z[:, COL_UVP0:COL_UVP0 + 3 * K])
    md1 = _md_block(z[:, COL_UVP1:COL_UVP1 + 3 * K])
    loss_args0 = _md_nll(md0, a0)
    loss_args1 = _md_nll(md1, a1)

    loss = (loss_idx + BASE_TYPE_COEF * loss_type
            + ARG_COEF * (loss_args0 + loss_args1))

    # ---- assemble the result row in registers; ONE store, no zero-fill --------
    pad = jnp.zeros((b, OUT_W - O_USED), jnp.float32)
    out_ref[...] = jnp.concatenate(
        [loss, acc_idx, acc_type, md0, md1, pad], axis=-1)


# ------------------------- host-side parameter packing -------------------------
def pack_params(p):
    """Pack the 8 Linear layers (weights AND biases) into one (48, 128) slab."""
    w = jnp.zeros((K_PAD, N_PAD), jnp.float32)
    w = w.at[ROW_H:ROW_H + HIDDEN, COL_A:COL_A + N_ACTIONS].set(p["W_act"])
    w = w.at[ROW_H:ROW_H + HIDDEN, COL_T:COL_T + N_TYPES].set(p["W_type_h"])
    w = w.at[ROW_A:ROW_A + N_ACTIONS, COL_T:COL_T + N_TYPES].set(p["W_type_a"])
    w = w.at[ROW_H:ROW_H + HIDDEN, COL_UVP0:COL_UVP0 + 3 * K].set(p["W0_h"])
    w = w.at[ROW_A:ROW_A + N_ACTIONS, COL_UVP0:COL_UVP0 + 3 * K].set(p["W0_a"])
    w = w.at[ROW_T:ROW_T + N_TYPES, COL_UVP0:COL_UVP0 + 3 * K].set(p["W0_t"])
    w = w.at[ROW_H:ROW_H + HIDDEN, COL_UVP1:COL_UVP1 + 3 * K].set(p["W1_h"])
    w = w.at[ROW_A:ROW_A + N_ACTIONS, COL_UVP1:COL_UVP1 + 3 * K].set(p["W1_a"])
    w = w.at[ROW_T:ROW_T + N_TYPES, COL_UVP1:COL_UVP1 + 3 * K].set(p["W1_t"])
    w = w.at[ROW_G:ROW_G + 1, COL_UVP1:COL_UVP1 + 3 * K].set(p["W1_g"])
    # biases folded into the "always 1" aux lane (row ROW_ONE)
    w = w.at[ROW_ONE, COL_A:COL_A + N_ACTIONS].set(p["b_act"][0])
    w = w.at[ROW_ONE, COL_T:COL_T + N_TYPES].set(p["b_type"][0])
    w = w.at[ROW_ONE, COL_UVP0:COL_UVP0 + 3 * K].set(p["b0"][0])
    w = w.at[ROW_ONE, COL_UVP1:COL_UVP1 + 3 * K].set(p["b1"][0])
    return w


# ------------------------------- batch tiling ----------------------------------
def _round_up(x, m):
    return ((x + m - 1) // m) * m


def _choose_block_b(B):
    """Row-tile: big tiles to amortize the ~0.35us/step overhead, but guarantee >=2
    grid steps for large B so the 'parallel' axis shards both TCs on v7x, and cap at
    8192 rows (~6.5 MiB double-buffered VMEM, under all generations' scoped defaults)."""
    if B <= 1024:
        return _round_up(B, 8)
    half = _round_up(pl.cdiv(B, 2), 8)
    return min(8192, half)


# ------------------------------- wrapper ---------------------------------------
def primitive_decoder_forward(lstm_out, target_primitive, w_packed, sample_key):
    """Returns (loss_primitive, acc_base_idx, acc_base_type, acc_args0, acc_args1, md0, md1)."""
    B = lstm_out.shape[0]

    block_b = _choose_block_b(B)
    grid_steps = pl.cdiv(B, block_b)
    B_pad = grid_steps * block_b
    if B_pad != B:
        lstm_in = jnp.pad(lstm_out, ((0, B_pad - B), (0, 0)))
        tgt_in = jnp.pad(target_primitive, ((0, B_pad - B), (0, 0)))
    else:
        lstm_in, tgt_in = lstm_out, target_primitive

    out = pl.pallas_call(
        _decoder_kernel,
        out_shape=jax.ShapeDtypeStruct((B_pad, OUT_W), jnp.float32),
        grid_spec=pltpu.PrefetchScalarGridSpec(
            num_scalar_prefetch=0,
            grid=(grid_steps,),
            in_specs=[
                pl.BlockSpec((block_b, HIDDEN), lambda i: (i, 0)),
                pl.BlockSpec((block_b, 4), lambda i: (i, 0)),
                pl.BlockSpec((K_PAD, N_PAD), lambda i: (0, 0)),   # weights resident across grid
            ],
            out_specs=pl.BlockSpec((block_b, OUT_W), lambda i: (i, 0)),
        ),
        compiler_params=pltpu.CompilerParams(dimension_semantics=("parallel",)),
    )(lstm_in, tgt_in, w_packed)

    out = out[:B]
    loss_prim = out[:, O_LOSS]
    acc_idx = out[:, O_ACC_IDX]
    acc_type = out[:, O_ACC_TYPE]
    u0 = out[:, O_MD0:O_MD0 + K]
    v0 = out[:, O_MD0 + K:O_MD0 + 2 * K]
    p0 = out[:, O_MD0 + 2 * K:O_MD0 + 3 * K]
    u1 = out[:, O_MD1:O_MD1 + K]
    v1 = out[:, O_MD1 + K:O_MD1 + 2 * K]
    p1 = out[:, O_MD1 + 2 * K:O_MD1 + 3 * K]

    # sample_MD (torch.multinomial + torch.randn) done in plain JAX glue.
    # TODO(synk): stochastic sampling uses jax.random; matches distribution, not torch bit-exact.
    def _sample_md(key, u, v, p):
        k1, k2 = jax.random.split(key)
        j = jax.random.categorical(k1, p, axis=-1)                    # p is log-probs
        u_j = jnp.take_along_axis(u, j[:, None], axis=1)
        v_j = jnp.take_along_axis(v, j[:, None], axis=1)
        s = jax.random.normal(k2, u_j.shape, dtype=u.dtype) * jnp.sqrt(v_j) + u_j
        return jnp.clip(s, 0.01, 1.0)

    k0, k1 = jax.random.split(sample_key)
    s0 = _sample_md(k0, u0, v0, p0)
    s1 = _sample_md(k1, u1, v1, p1)
    acc_args0 = -(s0[:, 0] - target_primitive[:, 2]) ** 2
    acc_args1 = -(s1[:, 0] - target_primitive[:, 3]) ** 2
    return (loss_prim, acc_idx, acc_type, acc_args0, acc_args1,
            (u0, v0, p0), (u1, v1, p1))


# ------------------------- deterministic parameter init -------------------------
def init_params(key):
    def lin(k, din, dout, scale=0.08):
        kw, kb = jax.random.split(k)
        return (scale * jax.random.normal(kw, (din, dout), jnp.float32),
                scale * jax.random.normal(kb, (1, dout), jnp.float32))

    ks = jax.random.split(key, 12)
    p = {}
    p["W_act"], p["b_act"] = lin(ks[0], HIDDEN, N_ACTIONS)
    p["W_type_h"], p["b_type"] = lin(ks[1], HIDDEN, N_TYPES)
    p["W_type_a"], _ = lin(ks[2], N_ACTIONS, N_TYPES)
    p["W0_h"], p["b0"] = lin(ks[3], HIDDEN, 3 * K)
    p["W0_a"], _ = lin(ks[4], N_ACTIONS, 3 * K)
    p["W0_t"], _ = lin(ks[5], N_TYPES, 3 * K)
    p["W1_h"], p["b1"] = lin(ks[6], HIDDEN, 3 * K)
    p["W1_a"], _ = lin(ks[7], N_ACTIONS, 3 * K)
    p["W1_t"], _ = lin(ks[8], N_TYPES, 3 * K)
    p["W1_g"], _ = lin(ks[9], 1, 3 * K)
    return p


# ------------------------------ pure-JAX reference ------------------------------
def reference(lstm_out, tgt, p):
    x = lstm_out
    t_idx = tgt[:, 0].astype(jnp.int32)
    t_type = tgt[:, 1].astype(jnp.int32)
    a0 = tgt[:, 2:3]
    a1 = tgt[:, 3:4]

    logits_a = x @ p["W_act"] + p["b_act"]
    loss_idx = -jnp.take_along_axis(jax.nn.log_softmax(logits_a, -1), t_idx[:, None], 1)[:, 0]
    acc_idx = (jnp.argmax(logits_a, -1) == t_idx).astype(jnp.float32)
    oh_idx = jax.nn.one_hot(t_idx, N_ACTIONS, dtype=jnp.float32)

    logits_t = x @ p["W_type_h"] + oh_idx @ p["W_type_a"] + p["b_type"]
    loss_type = -jnp.take_along_axis(jax.nn.log_softmax(logits_t, -1), t_type[:, None], 1)[:, 0]
    acc_type = (jnp.argmax(logits_t, -1) == t_type).astype(jnp.float32)
    oh_type = jax.nn.one_hot(t_type, N_TYPES, dtype=jnp.float32)

    upper, lower = BOUNDS
    db = upper - lower

    def md(uvp):
        u = db * jax.nn.sigmoid(uvp[:, 0:K]) + lower
        v = jax.nn.softplus(uvp[:, K:2 * K]) + EPSILON
        pp = jax.nn.log_softmax(uvp[:, 2 * K:3 * K], axis=-1)
        return u, v, pp

    uvp0 = x @ p["W0_h"] + oh_idx @ p["W0_a"] + oh_type @ p["W0_t"] + p["b0"]
    u0, v0, p0 = md(uvp0)
    uvp1 = (x @ p["W1_h"] + oh_idx @ p["W1_a"] + oh_type @ p["W1_t"]
            + a0 * p["W1_g"] + p["b1"])
    u1, v1, p1 = md(uvp1)

    def nll(u, v, pp, t):
        d = u - t
        ll = -d * d / (2.0 * v) - 0.5 * jnp.log(v) + pp - LOG_SQRT_2PI
        return -jax.scipy.special.logsumexp(ll, axis=-1)

    loss = (loss_idx + BASE_TYPE_COEF * loss_type
            + ARG_COEF * (nll(u0, v0, p0, a0) + nll(u1, v1, p1, a1)))
    return loss, acc_idx, acc_type, (u0, v0, p0), (u1, v1, p1)


# ------------------------------------ main --------------------------------------
if __name__ == "__main__":
    key = jax.random.PRNGKey(0)
    k_param, k_x, k_idx, k_type, k_args, k_sample = jax.random.split(key, 6)

    params = init_params(k_param)
    w_packed = pack_params(params)   # pack once host-side (weights + biases)

    B = 8
    lstm_out = jax.random.normal(k_x, (B, HIDDEN), jnp.float32)
    t_idx = jax.random.randint(k_idx, (B,), 0, N_ACTIONS).astype(jnp.float32)
    t_type = jax.random.randint(k_type, (B,), 0, N_TYPES).astype(jnp.float32)
    t_args = jax.random.uniform(k_args, (B, 2), jnp.float32, 0.05, 0.95)
    target_primitive = jnp.stack([t_idx, t_type, t_args[:, 0], t_args[:, 1]], axis=-1)

    fwd = jax.jit(primitive_decoder_forward)
    outs = fwd(lstm_out, target_primitive, w_packed, k_sample)
    outs = jax.block_until_ready(outs)
    loss_prim, acc_idx, acc_type, acc_args0, acc_args1, md0, md1 = outs

    # verify the kernel against a pure-JAX reference of the deterministic pieces
    r_loss, r_acc_idx, r_acc_type, (ru0, rv0, rp0), (ru1, rv1, rp1) = reference(
        lstm_out, target_primitive, params)
    import numpy as np
    np.testing.assert_allclose(np.asarray(loss_prim), np.asarray(r_loss), rtol=5e-3, atol=5e-3)
    np.testing.assert_allclose(np.asarray(acc_idx), np.asarray(r_acc_idx), atol=1e-6)
    np.testing.assert_allclose(np.asarray(acc_type), np.asarray(r_acc_type), atol=1e-6)
    np.testing.assert_allclose(np.asarray(md0[0]), np.asarray(ru0), rtol=5e-3, atol=5e-3)
    np.testing.assert_allclose(np.asarray(md0[1]), np.asarray(rv0), rtol=5e-3, atol=5e-3)
    np.testing.assert_allclose(np.asarray(md0[2]), np.asarray(rp0), rtol=5e-3, atol=5e-3)
    np.testing.assert_allclose(np.asarray(md1[0]), np.asarray(ru1), rtol=5e-3, atol=5e-3)
    np.testing.assert_allclose(np.asarray(md1[1]), np.asarray(rv1), rtol=5e-3, atol=5e-3)
    np.testing.assert_allclose(np.asarray(md1[2]), np.asarray(rp1), rtol=5e-3, atol=5e-3)

    print("KERNEL_OK")
</pallas_src>

<mosaic_0001>
module attributes {stable_mosaic.version = 11 : i64} {
  func.func @_decoder_kernel(%arg0: i32, %arg1: memref<8x32xf32, #tpu.memory_space<vmem>>, %arg2: memref<8x4xf32, #tpu.memory_space<vmem>>, %arg3: memref<48x128xf32, #tpu.memory_space<vmem>>, %arg4: memref<8x64xf32, #tpu.memory_space<vmem>>) attributes {dimension_semantics = [#tpu.dimension_semantics<parallel>], iteration_bounds = array<i64: 1>, scalar_prefetch = 0 : i64, scratch_operands = 0 : i64, tpu.core_type = #tpu.core_type<tc>, window_params = [{transform_indices = @transform_0, window_bounds = array<i64: 8, 32>}, {transform_indices = @transform_1, window_bounds = array<i64: 8, 4>}, {pipeline_mode = #tpu.pipeline_mode<synchronous>, transform_indices = @transform_2, window_bounds = array<i64: 48, 128>}, {transform_indices = @transform_3, window_bounds = array<i64: 8, 64>}]} {
    %c0 = arith.constant 0 : index
    %c0_0 = arith.constant 0 : index
    %0 = vector.load %arg1[%c0, %c0_0] : memref<8x32xf32, #tpu.memory_space<vmem>>, vector<8x32xf32>
    %c0_1 = arith.constant 0 : index
    %c0_2 = arith.constant 0 : index
    %1 = vector.load %arg2[%c0_1, %c0_2] : memref<8x4xf32, #tpu.memory_space<vmem>>, vector<8x4xf32>
    %2 = vector.extract_strided_slice %1 {offsets = [0, 0], sizes = [8, 1], strides = [1, 1]} : vector<8x4xf32> to vector<8x1xf32>
    %3 = arith.fptosi %2 : vector<8x1xf32> to vector<8x1xi32>
    %4 = vector.extract_strided_slice %1 {offsets = [0, 1], sizes = [8, 1], strides = [1, 1]} : vector<8x4xf32> to vector<8x1xf32>
    %5 = arith.fptosi %4 : vector<8x1xf32> to vector<8x1xi32>
    %6 = vector.extract_strided_slice %1 {offsets = [0, 2], sizes = [8, 1], strides = [1, 1]} : vector<8x4xf32> to vector<8x1xf32>
    %7 = vector.extract_strided_slice %1 {offsets = [0, 3], sizes = [8, 1], strides = [1, 1]} : vector<8x4xf32> to vector<8x1xf32>
    %8 = tpu.iota {dimensions = array<i32: 1>} : vector<8x16xi32>
    %9 = vector.broadcast %3 : vector<8x1xi32> to vector<8x16xi32>
    %10 = arith.cmpi eq, %8, %9 : vector<8x16xi32>
    %c6_i32 = arith.constant 6 : i32
    %11 = vector.broadcast %c6_i32 : i32 to vector<8x1xi32>
    %12 = arith.addi %5, %11 : vector<8x1xi32>
    %13 = vector.broadcast %12 : vector<8x1xi32> to vector<8x16xi32>
    %14 = arith.cmpi eq, %8, %13 : vector<8x16xi32>
    %15 = arith.ori %10, %14 : vector<8x16xi1>
    %16 = arith.extui %15 : vector<8x16xi1> to vector<8x16xi32>
    %17 = arith.sitofp %16 : vector<8x16xi32> to vector<8x16xf32>
    %c11_i32 = arith.constant 11 : i32
    %18 = vector.broadcast %c11_i32 : i32 to vector<8x16xi32>
    %19 = arith.cmpi eq, %8, %18 : vector<8x16xi32>
    %cst = arith.constant 0.000000e+00 : f32
    %20 = vector.shape_cast %6 : vector<8x1xf32> to vector<8x1xf32>
    %21 = vector.broadcast %20 : vector<8x1xf32> to vector<8x16xf32>
    %22 = vector.broadcast %cst : f32 to vector<8x16xf32>
    %23 = arith.select %19, %21, %22 : vector<8x16xi1>, vector<8x16xf32>
    %24 = arith.addf %17, %23 : vector<8x16xf32>
    %c12_i32 = arith.constant 12 : i32
    %25 = vector.broadcast %c12_i32 : i32 to vector<8x16xi32>
    %26 = arith.cmpi eq, %8, %25 : vector<8x16xi32>
    %27 = arith.extui %26 : vector<8x16xi1> to vector<8x16xi32>
    %28 = arith.sitofp %27 : vector<8x16xi32> to vector<8x16xf32>
    %29 = arith.addf %24, %28 : vector<8x16xf32>
    %30 = vector.extract_strided_slice %29 {offsets = [0, 0], sizes = [8, 6], strides = [1, 1]} : vector<8x16xf32> to vector<8x6xf32>
    %31 = vector.extract_strided_slice %29 {offsets = [0, 6], sizes = [8, 5], strides = [1, 1]} : vector<8x16xf32> to vector<8x5xf32>
    %32 = tpu.concatenate %0, %29 in 1 : vector<8x32xf32>, vector<8x16xf32> -> vector<8x48xf32>
    %c0_3 = arith.constant 0 : index
    %c0_4 = arith.constant 0 : index
    %33 = vector.load %arg3[%c0_3, %c0_4] : memref<48x128xf32, #tpu.memory_space<vmem>>, vector<48x128xf32>
    %cst_5 = arith.constant dense<0.000000e+00> : vector<8x128xf32>
    %34 = tpu.matmul %32, %33, %cst_5 {dimension_numbers = #tpu.dot_dimension_numbers<[1], [0], [0], [1], [0, 0, 1, 1], [], []>} : vector<8x48xf32>, vector<48x128xf32>, vector<8x128xf32> -> vector<8x128xf32>
    %35 = vector.extract_strided_slice %34 {offsets = [0, 0], sizes = [8, 6], strides = [1, 1]} : vector<8x128xf32> to vector<8x6xf32>
    %36 = vector.extract_strided_slice %34 {offsets = [0, 6], sizes = [8, 5], strides = [1, 1]} : vector<8x128xf32> to vector<8x5xf32>
    %cst_6 = arith.constant dense<0xFF800000> : vector<8xf32>
    %37 = vector.multi_reduction <maximumf>, %35, %cst_6 [1] : vector<8x6xf32> to vector<8xf32>
    %38 = vector.shape_cast %37 : vector<8xf32> to vector<8x1xf32>
    %39 = vector.broadcast %38 : vector<8x1xf32> to vector<8x6xf32>
    %40 = arith.subf %35, %39 : vector<8x6xf32>
    %41 = math.exp %40 : vector<8x6xf32>
    %cst_7 = arith.constant dense<0.000000e+00> : vector<8xf32>
    %42 = vector.multi_reduction <add>, %41, %cst_7 [1] : vector<8x6xf32> to vector<8xf32>
    %43 = vector.shape_cast %42 : vector<8xf32> to vector<8x1xf32>
    %44 = math.log %43 : vector<8x1xf32>
    %45 = arith.addf %38, %44 : vector<8x1xf32>
    %46 = arith.mulf %35, %30 : vector<8x6xf32>
    %cst_8 = arith.constant dense<0.000000e+00> : vector<8xf32>
    %47 = vector.multi_reduction <add>, %46, %cst_8 [1] : vector<8x6xf32> to vector<8xf32>
    %48 = vector.shape_cast %47 : vector<8xf32> to vector<8x1xf32>
    %49 = arith.subf %45, %48 : vector<8x1xf32>
    %50 = tpu.iota {dimensions = array<i32: 1>} : vector<8x6xi32>
    %51 = vector.broadcast %38 : vector<8x1xf32> to vector<8x6xf32>
    %52 = arith.cmpf oeq, %35, %51 : vector<8x6xf32>
    %c6_i32_9 = arith.constant 6 : i32
    %53 = vector.broadcast %c6_i32_9 : i32 to vector<8x6xi32>
    %54 = arith.select %52, %50, %53 : vector<8x6xi1>, vector<8x6xi32>
    %cst_10 = arith.constant dense<2147483647> : vector<8xi32>
    %55 = vector.multi_reduction <minsi>, %54, %cst_10 [1] : vector<8x6xi32> to vector<8xi32>
    %56 = vector.shape_cast %55 : vector<8xi32> to vector<8x1xi32>
    %57 = arith.cmpi eq, %56, %3 : vector<8x1xi32>
    %58 = arith.extui %57 : vector<8x1xi1> to vector<8x1xi32>
    %59 = arith.sitofp %58 : vector<8x1xi32> to vector<8x1xf32>
    %cst_11 = arith.constant dense<0xFF800000> : vector<8xf32>
    %60 = vector.multi_reduction <maximumf>, %36, %cst_11 [1] : vector<8x5xf32> to vector<8xf32>
    %61 = vector.shape_cast %60 : vector<8xf32> to vector<8x1xf32>
    %62 = vector.broadcast %61 : vector<8x1xf32> to vector<8x5xf32>
    %63 = arith.subf %36, %62 : vector<8x5xf32>
    %64 = math.exp %63 : vector<8x5xf32>
    %cst_12 = arith.constant dense<0.000000e+00> : vector<8xf32>
    %65 = vector.multi_reduction <add>, %64, %cst_12 [1] : vector<8x5xf32> to vector<8xf32>
    %66 = vector.shape_cast %65 : vector<8xf32> to vector<8x1xf32>
    %67 = math.log %66 : vector<8x1xf32>
    %68 = arith.addf %61, %67 : vector<8x1xf32>
    %69 = arith.mulf %36, %31 : vector<8x5xf32>
    %cst_13 = arith.constant dense<0.000000e+00> : vector<8xf32>
    %70 = vector.multi_reduction <add>, %69, %cst_13 [1] : vector<8x5xf32> to vector<8xf32>
    %71 = vector.shape_cast %70 : vector<8xf32> to vector<8x1xf32>
    %72 = arith.subf %68, %71 : vector<8x1xf32>
    %73 = tpu.iota {dimensions = array<i32: 1>} : vector<8x5xi32>
    %74 = vector.broadcast %61 : vector<8x1xf32> to vector<8x5xf32>
    %75 = arith.cmpf oeq, %36, %74 : vector<8x5xf32>
    %c5_i32 = arith.constant 5 : i32
    %76 = vector.broadcast %c5_i32 : i32 to vector<8x5xi32>
    %77 = arith.select %75, %73, %76 : vector<8x5xi1>, vector<8x5xi32>
    %cst_14 = arith.constant dense<2147483647> : vector<8xi32>
    %78 = vector.multi_reduction <minsi>, %77, %cst_14 [1] : vector<8x5xi32> to vector<8xi32>
    %79 = vector.shape_cast %78 : vector<8xi32> to vector<8x1xi32>
    %80 = arith.cmpi eq, %79, %5 : vector<8x1xi32>
    %81 = arith.extui %80 : vector<8x1xi1> to vector<8x1xi32>
    %82 = arith.sitofp %81 : vector<8x1xi32> to vector<8x1xf32>
    %83 = vector.extract_strided_slice %34 {offsets = [0, 11], sizes = [8, 15], strides = [1, 1]} : vector<8x128xf32> to vector<8x15xf32>
    %cst_15 = arith.constant 0.000000e+00 : f32
    %84 = vector.broadcast %cst_15 : f32 to vector<8x15xf32>
    %85 = arith.subf %84, %83 : vector<8x15xf32>
    %86 = math.exp %85 : vector<8x15xf32>
    %cst_16 = arith.constant 1.000000e+00 : f32
    %87 = vector.broadcast %cst_16 : f32 to vector<8x15xf32>
    %88 = arith.addf %87, %86 : vector<8x15xf32>
    %cst_17 = arith.constant 1.000000e+00 : f32
    %89 = vector.broadcast %cst_17 : f32 to vector<8x15xf32>
    %90 = arith.divf %89, %88 : vector<8x15xf32>
    %cst_18 = arith.constant -1.000000e+00 : f32
    %91 = vector.broadcast %cst_18 : f32 to vector<8x15xf32>
    %92 = arith.mulf %91, %90 : vector<8x15xf32>
    %cst_19 = arith.constant 1.000000e+00 : f32
    %93 = vector.broadcast %cst_19 : f32 to vector<8x15xf32>
    %94 = arith.addf %92, %93 : vector<8x15xf32>
    %cst_20 = arith.constant 0.000000e+00 : f32
    %95 = vector.broadcast %cst_20 : f32 to vector<8x15xf32>
    %96 = arith.maximumf %83, %95 : vector<8x15xf32>
    %97 = math.absf %83 : vector<8x15xf32>
    %cst_21 = arith.constant 0.000000e+00 : f32
    %98 = vector.broadcast %cst_21 : f32 to vector<8x15xf32>
    %99 = arith.subf %98, %97 : vector<8x15xf32>
    %100 = math.exp %99 : vector<8x15xf32>
    %cst_22 = arith.constant 1.000000e+00 : f32
    %101 = vector.broadcast %cst_22 : f32 to vector<8x15xf32>
    %102 = arith.addf %101, %100 : vector<8x15xf32>
    %103 = math.log %102 : vector<8x15xf32>
    %104 = arith.addf %96, %103 : vector<8x15xf32>
    %cst_23 = arith.constant 9.99999974E-5 : f32
    %105 = vector.broadcast %cst_23 : f32 to vector<8x15xf32>
    %106 = arith.addf %104, %105 : vector<8x15xf32>
    %107 = vector.extract_strided_slice %83 {offsets = [0, 10], sizes = [8, 5], strides = [1, 1]} : vector<8x15xf32> to vector<8x5xf32>
    %cst_24 = arith.constant dense<0xFF800000> : vector<8xf32>
    %108 = vector.multi_reduction <maximumf>, %107, %cst_24 [1] : vector<8x5xf32> to vector<8xf32>
    %109 = vector.shape_cast %108 : vector<8xf32> to vector<8x1xf32>
    %110 = vector.broadcast %109 : vector<8x1xf32> to vector<8x5xf32>
    %111 = arith.subf %107, %110 : vector<8x5xf32>
    %112 = math.exp %111 : vector<8x5xf32>
    %cst_25 = arith.constant dense<0.000000e+00> : vector<8xf32>
    %113 = vector.multi_reduction <add>, %112, %cst_25 [1] : vector<8x5xf32> to vector<8xf32>
    %114 = vector.shape_cast %113 : vector<8xf32> to vector<8x1xf32>
    %115 = math.log %114 : vector<8x1xf32>
    %116 = arith.addf %109, %115 : vector<8x1xf32>
    %117 = vector.broadcast %116 : vector<8x1xf32> to vector<8x15xf32>
    %118 = arith.subf %83, %117 : vector<8x15xf32>
    %119 = tpu.iota {dimensions = array<i32: 1>} : vector<8x15xi32>
    %c5_i32_26 = arith.constant 5 : i32
    %120 = vector.broadcast %c5_i32_26 : i32 to vector<8x15xi32>
    %121 = arith.cmpi slt, %119, %120 : vector<8x15xi32>
    %c10_i32 = arith.constant 10 : i32
    %122 = vector.broadcast %c10_i32 : i32 to vector<8x15xi32>
    %123 = arith.cmpi slt, %119, %122 : vector<8x15xi32>
    %124 = arith.select %123, %106, %118 : vector<8x15xi1>, vector<8x15xf32>
    %125 = arith.select %121, %94, %124 : vector<8x15xi1>, vector<8x15xf32>
    %126 = vector.extract_strided_slice %34 {offsets = [0, 26], sizes = [8, 15], strides = [1, 1]} : vector<8x128xf32> to vector<8x15xf32>
    %cst_27 = arith.constant 0.000000e+00 : f32
    %127 = vector.broadcast %cst_27 : f32 to vector<8x15xf32>
    %128 = arith.subf %127, %126 : vector<8x15xf32>
    %129 = math.exp %128 : vector<8x15xf32>
    %cst_28 = arith.constant 1.000000e+00 : f32
    %130 = vector.broadcast %cst_28 : f32 to vector<8x15xf32>
    %131 = arith.addf %130, %129 : vector<8x15xf32>
    %cst_29 = arith.constant 1.000000e+00 : f32
    %132 = vector.broadcast %cst_29 : f32 to vector<8x15xf32>
    %133 = arith.divf %132, %131 : vector<8x15xf32>
    %cst_30 = arith.constant -1.000000e+00 : f32
    %134 = vector.broadcast %cst_30 : f32 to vector<8x15xf32>
    %135 = arith.mulf %134, %133 : vector<8x15xf32>
    %cst_31 = arith.constant 1.000000e+00 : f32
    %136 = vector.broadcast %cst_31 : f32 to vector<8x15xf32>
    %137 = arith.addf %135, %136 : vector<8x15xf32>
    %cst_32 = arith.constant 0.000000e+00 : f32
    %138 = vector.broadcast %cst_32 : f32 to vector<8x15xf32>
    %139 = arith.maximumf %126, %138 : vector<8x15xf32>
    %140 = math.absf %126 : vector<8x15xf32>
    %cst_33 = arith.constant 0.000000e+00 : f32
    %141 = vector.broadcast %cst_33 : f32 to vector<8x15xf32>
    %142 = arith.subf %141, %140 : vector<8x15xf32>
    %143 = math.exp %142 : vector<8x15xf32>
    %cst_34 = arith.constant 1.000000e+00 : f32
    %144 = vector.broadcast %cst_34 : f32 to vector<8x15xf32>
    %145 = arith.addf %144, %143 : vector<8x15xf32>
    %146 = math.log %145 : vector<8x15xf32>
    %147 = arith.addf %139, %146 : vector<8x15xf32>
    %cst_35 = arith.constant 9.99999974E-5 : f32
    %148 = vector.broadcast %cst_35 : f32 to vector<8x15xf32>
    %149 = arith.addf %147, %148 : vector<8x15xf32>
    %150 = vector.extract_strided_slice %126 {offsets = [0, 10], sizes = [8, 5], strides = [1, 1]} : vector<8x15xf32> to vector<8x5xf32>
    %cst_36 = arith.constant dense<0xFF800000> : vector<8xf32>
    %151 = vector.multi_reduction <maximumf>, %150, %cst_36 [1] : vector<8x5xf32> to vector<8xf32>
    %152 = vector.shape_cast %151 : vector<8xf32> to vector<8x1xf32>
    %153 = vector.broadcast %152 : vector<8x1xf32> to vector<8x5xf32>
    %154 = arith.subf %150, %153 : vector<8x5xf32>
    %155 = math.exp %154 : vector<8x5xf32>
    %cst_37 = arith.constant dense<0.000000e+00> : vector<8xf32>
    %156 = vector.multi_reduction <add>, %155, %cst_37 [1] : vector<8x5xf32> to vector<8xf32>
    %157 = vector.shape_cast %156 : vector<8xf32> to vector<8x1xf32>
    %158 = math.log %157 : vector<8x1xf32>
    %159 = arith.addf %152, %158 : vector<8x1xf32>
    %160 = vector.broadcast %159 : vector<8x1xf32> to vector<8x15xf32>
    %161 = arith.subf %126, %160 : vector<8x15xf32>
    %162 = tpu.iota {dimensions = array<i32: 1>} : vector<8x15xi32>
    %c5_i32_38 = arith.constant 5 : i32
    %163 = vector.broadcast %c5_i32_38 : i32 to vector<8x15xi32>
    %164 = arith.cmpi slt, %162, %163 : vector<8x15xi32>
    %c10_i32_39 = arith.constant 10 : i32
    %165 = vector.broadcast %c10_i32_39 : i32 to vector<8x15xi32>
    %166 = arith.cmpi slt, %162, %165 : vector<8x15xi32>
    %167 = arith.select %166, %149, %161 : vector<8x15xi1>, vector<8x15xf32>
    %168 = arith.select %164, %137, %167 : vector<8x15xi1>, vector<8x15xf32>
    %169 = vector.extract_strided_slice %125 {offsets = [0, 0], sizes = [8, 5], strides = [1, 1]} : vector<8x15xf32> to vector<8x5xf32>
    %170 = vector.extract_strided_slice %125 {offsets = [0, 5], sizes = [8, 5], strides = [1, 1]} : vector<8x15xf32> to vector<8x5xf32>
    %171 = vector.extract_strided_slice %125 {offsets = [0, 10], sizes = [8, 5], strides = [1, 1]} : vector<8x15xf32> to vector<8x5xf32>
    %172 = vector.broadcast %6 : vector<8x1xf32> to vector<8x5xf32>
    %173 = arith.subf %169, %172 : vector<8x5xf32>
    %cst_40 = arith.constant 0.000000e+00 : f32
    %174 = vector.broadcast %cst_40 : f32 to vector<8x5xf32>
    %175 = arith.subf %174, %173 : vector<8x5xf32>
    %176 = arith.mulf %175, %173 : vector<8x5xf32>
    %cst_41 = arith.constant 2.000000e+00 : f32
    %177 = vector.broadcast %cst_41 : f32 to vector<8x5xf32>
    %178 = arith.mulf %177, %170 : vector<8x5xf32>
    %179 = arith.divf %176, %178 : vector<8x5xf32>
    %180 = math.log %170 : vector<8x5xf32>
    %cst_42 = arith.constant 5.000000e-01 : f32
    %181 = vector.broadcast %cst_42 : f32 to vector<8x5xf32>
    %182 = arith.mulf %181, %180 : vector<8x5xf32>
    %183 = arith.subf %179, %182 : vector<8x5xf32>
    %184 = arith.addf %183, %171 : vector<8x5xf32>
    %cst_43 = arith.constant 0.399089932 : f32
    %185 = vector.broadcast %cst_43 : f32 to vector<8x5xf32>
    %186 = arith.subf %184, %185 : vector<8x5xf32>
    %cst_44 = arith.constant dense<0xFF800000> : vector<8xf32>
    %187 = vector.multi_reduction <maximumf>, %186, %cst_44 [1] : vector<8x5xf32> to vector<8xf32>
    %188 = vector.shape_cast %187 : vector<8xf32> to vector<8x1xf32>
    %189 = vector.broadcast %188 : vector<8x1xf32> to vector<8x5xf32>
    %190 = arith.subf %186, %189 : vector<8x5xf32>
    %191 = math.exp %190 : vector<8x5xf32>
    %cst_45 = arith.constant dense<0.000000e+00> : vector<8xf32>
    %192 = vector.multi_reduction <add>, %191, %cst_45 [1] : vector<8x5xf32> to vector<8xf32>
    %193 = vector.shape_cast %192 : vector<8xf32> to vector<8x1xf32>
    %194 = math.log %193 : vector<8x1xf32>
    %195 = arith.addf %188, %194 : vector<8x1xf32>
    %cst_46 = arith.constant 0.000000e+00 : f32
    %196 = vector.broadcast %cst_46 : f32 to vector<8x1xf32>
    %197 = arith.subf %196, %195 : vector<8x1xf32>
    %198 = vector.extract_strided_slice %168 {offsets = [0, 0], sizes = [8, 5], strides = [1, 1]} : vector<8x15xf32> to vector<8x5xf32>
    %199 = vector.extract_strided_slice %168 {offsets = [0, 5], sizes = [8, 5], strides = [1, 1]} : vector<8x15xf32> to vector<8x5xf32>
    %200 = vector.extract_strided_slice %168 {offsets = [0, 10], sizes = [8, 5], strides = [1, 1]} : vector<8x15xf32> to vector<8x5xf32>
    %201 = vector.broadcast %7 : vector<8x1xf32> to vector<8x5xf32>
    %202 = arith.subf %198, %201 : vector<8x5xf32>
    %cst_47 = arith.constant 0.000000e+00 : f32
    %203 = vector.broadcast %cst_47 : f32 to vector<8x5xf32>
    %204 = arith.subf %203, %202 : vector<8x5xf32>
    %205 = arith.mulf %204, %202 : vector<8x5xf32>
    %cst_48 = arith.constant 2.000000e+00 : f32
    %206 = vector.broadcast %cst_48 : f32 to vector<8x5xf32>
    %207 = arith.mulf %206, %199 : vector<8x5xf32>
    %208 = arith.divf %205, %207 : vector<8x5xf32>
    %209 = math.log %199 : vector<8x5xf32>
    %cst_49 = arith.constant 5.000000e-01 : f32
    %210 = vector.broadcast %cst_49 : f32 to vector<8x5xf32>
    %211 = arith.mulf %210, %209 : vector<8x5xf32>
    %212 = arith.subf %208, %211 : vector<8x5xf32>
    %213 = arith.addf %212, %200 : vector<8x5xf32>
    %cst_50 = arith.constant 0.399089932 : f32
    %214 = vector.broadcast %cst_50 : f32 to vector<8x5xf32>
    %215 = arith.subf %213, %214 : vector<8x5xf32>
    %cst_51 = arith.constant dense<0xFF800000> : vector<8xf32>
    %216 = vector.multi_reduction <maximumf>, %215, %cst_51 [1] : vector<8x5xf32> to vector<8xf32>
    %217 = vector.shape_cast %216 : vector<8xf32> to vector<8x1xf32>
    %218 = vector.broadcast %217 : vector<8x1xf32> to vector<8x5xf32>
    %219 = arith.subf %215, %218 : vector<8x5xf32>
    %220 = math.exp %219 : vector<8x5xf32>
    %cst_52 = arith.constant dense<0.000000e+00> : vector<8xf32>
    %221 = vector.multi_reduction <add>, %220, %cst_52 [1] : vector<8x5xf32> to vector<8xf32>
    %222 = vector.shape_cast %221 : vector<8xf32> to vector<8x1xf32>
    %223 = math.log %222 : vector<8x1xf32>
    %224 = arith.addf %217, %223 : vector<8x1xf32>
    %cst_53 = arith.constant 0.000000e+00 : f32
    %225 = vector.broadcast %cst_53 : f32 to vector<8x1xf32>
    %226 = arith.subf %225, %224 : vector<8x1xf32>
    %cst_54 = arith.constant 1.000000e+00 : f32
    %227 = vector.broadcast %cst_54 : f32 to vector<8x1xf32>
    %228 = arith.mulf %227, %72 : vector<8x1xf32>
    %229 = arith.addf %49, %228 : vector<8x1xf32>
    %230 = arith.addf %197, %226 : vector<8x1xf32>
    %cst_55 = arith.constant 1.000000e+00 : f32
    %231 = vector.broadcast %cst_55 : f32 to vector<8x1xf32>
    %232 = arith.mulf %231, %230 : vector<8x1xf32>
    %233 = arith.addf %229, %232 : vector<8x1xf32>
    %cst_56 = arith.constant 0.000000e+00 : f32
    %234 = vector.broadcast %cst_56 : f32 to vector<8x31xf32>
    %235 = tpu.concatenate %233, %59, %82, %125, %168, %234 in 1 : vector<8x1xf32>, vector<8x1xf32>, vector<8x1xf32>, vector<8x15xf32>, vector<8x15xf32>, vector<8x31xf32> -> vector<8x64xf32>
    %c0_57 = arith.constant 0 : index
    %c0_58 = arith.constant 0 : index
    %236 = vector.load %arg4[%c0_57, %c0_58] : memref<8x64xf32, #tpu.memory_space<vmem>>, vector<8x64xf32>
    tpu.vector_store %arg4[%c0_57, %c0_58], %235 {strides = array<i32>} : memref<8x64xf32, #tpu.memory_space<vmem>>, vector<8x64xf32>,
    return
  }
  func.func @transform_0(%arg0: i32) -> (i32, i32) {
    %c0_i32 = arith.constant 0 : i32
    %c0_i32_0 = arith.constant 0 : i32
    return %arg0, %c0_i32 : i32, i32
  }
  func.func @transform_1(%arg0: i32) -> (i32, i32) {
    %c0_i32 = arith.constant 0 : i32
    %c0_i32_0 = arith.constant 0 : i32
    return %arg0, %c0_i32 : i32, i32
  }
  func.func @transform_2(%arg0: i32) -> (i32, i32) {
    %c0_i32 = arith.constant 0 : i32
    %c0_i32_0 = arith.constant 0 : i32
    %c0_i32_1 = arith.constant 0 : i32
    return %c0_i32, %c0_i32_0 : i32, i32
  }
  func.func @transform_3(%arg0: i32) -> (i32, i32) {
    %c0_i32 = arith.constant 0 : i32
    %c0_i32_0 = arith.constant 0 : i32
    return %arg0, %c0_i32 : i32, i32
  }
}

</mosaic_0001>

<llo_original>
// kernel: primitive_decoder_forward.1
$region0: #{primitive_decoder_forward.1}
  #allocation0 [shape = 'u32[]', space=smem, size = 0x4, offset = 0x4, fixed_abs, tag = 'smem constant byte address 0x4 - core index']
  #allocation1 [shape = 'u32[144,128]{1,0:T(1,128)}', space=vmem, size = 0x12000, scoped, tag = 'internal scratch']
  %s0 = inlined_call_operand.vmem [shape: f32[8,32], index: 0, kind: input, shape index: {}]
  %s1 = inlined_call_operand.vmem [shape: f32[8,4], index: 1, kind: input, shape index: {}]
  %s2 = inlined_call_operand.hbm [shape: f32[48,128], index: 2, kind: input, shape index: {}]
  %s3 = inlined_call_operand.vmem [shape: f32[8,64], index: 3, kind: output, shape index: {}]
  %s4 = sld [smem:[#allocation0]]
  $region26: #{primitive_decoder_forward.1} parent=0
    _
  %s6 = ssub.s32 1, %s4
  %s7 = scalar_select 0, %s6, %s4
  $region1: #{primitive_decoder_forward.1} parent=0
    #allocation2 [shape = 'u8[24576]{0}', space=vmem, size = 0x6000, scoped, tag = 'input window, operand 2, single buffered']
    #allocation3 [shape = 's32[1]{0}', space=sflag, size = 0x4, scoped, tag = 'scoped memory for primitive_decoder_forward.1']
    %8 = vsyncpa [#allocation3], 0
    // Predicated region
    $region2: #{primitive_decoder_forward.1} parent=1 // pred_check
      _
    $region3: #{primitive_decoder_forward.1} parent=1 // pred_check_branch
      %10 = sbr.rel (0) target = $region5
    $region4: #{primitive_decoder_forward.1} parent=1 // pred_region
      _
    $region5: #{primitive_decoder_forward.1} parent=1 // pred_fallthru
      _
    // Predicated region
    $region6: #{primitive_decoder_forward.1} parent=1 // pred_check
      _
    $region7: #{primitive_decoder_forward.1} parent=1 // pred_check_branch
      %12 = sbr.rel (0) target = $region9
    $region8: #{primitive_decoder_forward.1} parent=1 // pred_region
      _
    $region9: #{primitive_decoder_forward.1} parent=1 // pred_fallthru
      _
    // Predicated region
    $region10: #{primitive_decoder_forward.1} parent=1 // pred_check
      _
    $region11: #{primitive_decoder_forward.1} parent=1 // pred_check_branch
      %14 = sbr.rel (0) target = $region13
    $region12: #{primitive_decoder_forward.1} parent=1 // pred_region
      %s16 = ssub.s32 768, 768
      %17 = vsyncadd [#allocation3], %s16
      %s18 = sshll.u32 [#allocation2], 4
      %s19 = int_to_ptr.vmem [resolvable:$true] %s18
      %24 = dma.hbm_to_vmem [thread:$0]  %s2, 768, %s19, [#allocation3], 128, 128, 8
    $region13: #{primitive_decoder_forward.1} parent=1 // pred_fallthru
      _
    // Predicated region
    $region14: #{primitive_decoder_forward.1} parent=1 // pred_check
      _
    $region15: #{primitive_decoder_forward.1} parent=1 // pred_check_branch
      %26 = sbr.rel (0) target = $region17
    $region16: #{primitive_decoder_forward.1} parent=1 // pred_region
      %27 = dma.done [#allocation3], 768
    $region17: #{primitive_decoder_forward.1} parent=1 // pred_fallthru
      _
    %v28 = vld [vmem:[%s0] sm:$0xff]
    %v29 = vld [vmem:[%s1] sm:$0xff]
    %v30 = vcvt.f32.s32.to.zero.pseudo %v29
    %v31 = vlaneseq
    %v32 = vand.u32 %v31, 127
    %33 = vset.pattern.permute.xlu0 0
    %34 = vperm.xlu0 %33, %v30
    %v35 = vpop.permute.xlu0 %34
    %vm36 = vcmp.eq.s32.totalorder %v32, %v35
    %v37 = vadd.s32 %v30, 6
    %38 = vset.pattern.permute.xlu0 1
    %39 = vperm.xlu0 %38, %v37
    %v40 = vpop.permute.xlu0 %39
    %vm41 = vcmp.eq.s32.totalorder %v32, %v40
    %vm42 = vmor %vm36, %vm41
    %v43 = vsel %vm42, 1, 0
    %v44 = vcvt.s32.f32 %v43
    %vm45 = vcmp.eq.s32.totalorder %v32, 11
    %47 = vset.pattern.permute.xlu0 2
    %48 = vperm.xlu0 %47, %v29
    %v49 = vpop.permute.xlu0 %48
    %v51 = vsel %vm45, %v49, 0.0
    %v52 = vadd.f32 %v44, %v51
    %vm53 = vcmp.eq.s32.totalorder %v32, 12
    %v54 = vsel %vm53, 1, 0
    %v55 = vcvt.s32.f32 %v54
    %v56 = vadd.f32 %v52, %v55
    %58 = vrot.lane.b32.xlu0 %v56, 32
    %v59 = vpop.permute.xlu0 %58
    %vm61 = vcmask 261120
    %v62 = vsel %vm61, %v28, %v59
    %v63 = vld [vmem:[#allocation2] sm:$0xff]
    %v64 = vld [vmem:[#allocation2 + $0x8] sm:$0xff]
    %v65 = vld [vmem:[#allocation2 + $0x10] sm:$0xff]
    %v66 = vld [vmem:[#allocation2 + $0x18] sm:$0xff]
    %v67 = vld [vmem:[#allocation2 + $0x20] sm:$0xff]
    %v68 = vld [vmem:[#allocation2 + $0x28] sm:$0xff]
    %vm69 = vcmask 392192
    %v71 = vsel %vm69, %v62, 0
    %73 = vmatprep.subr.mxu0 0.0
    %74 = vmatpush1.msra.mxu0 0.0
    %75 = vmatprep.subr.mxu0 0.0
    %76 = vmatpush1.msra.mxu0 0.0
    %77 = vmatprep.subr.mxu0 0.0
    %78 = vmatpush1.msra.mxu0 0.0
    %79 = vmatprep.subr.mxu0 0.0
    %80 = vmatpush1.msra.mxu0 0.0
    %81 = vmatprep.subr.mxu0 0.0
    %82 = vmatpush1.msra.mxu0 0.0
    %83 = vmatprep.subr.mxu0 0.0
    %84 = vmatpush1.msra.mxu0 0.0
    %85 = vmatprep.subr.mxu0 0.0
    %86 = vmatpush1.msra.mxu0 0.0
    %87 = vmatprep.subr.mxu0 0.0
    %88 = vmatpush1.msra.mxu0 0.0
    %89 = vmatprep.subr.mxu0 0.0
    %90 = vmatpush1.msra.mxu0 0.0
    %91 = vmatprep.subr.mxu0 0.0
    %92 = vmatpush1.msra.mxu0 0.0
    %93 = vmatprep.subr.mxu0 0.0
    %94 = vmatpush1.msra.mxu0 %v68
    %95 = vmatprep.subr.mxu0 0.0
    %96 = vmatpush1.msra.mxu0 %v67
    %97 = vmatprep.subr.mxu0 0.0
    %98 = vmatpush1.msra.mxu0 %v66
    %99 = vmatprep.subr.mxu0 0.0
    %100 = vmatpush1.msra.mxu0 %v65
    %101 = vmatprep.subr.mxu0 0.0
    %102 = vmatpush1.msra.mxu0 %v64
    %103 = vmatprep.subr.mxu0 0.0
    %104 = vmatpush1.msra.mxu0 %v63
    %105 = vmatprep.subr.mxu0 0.0
    %106 = vmatpush2.msra.mxu0 0.0
    %107 = vmatprep.subr.mxu0 0.0
    %108 = vmatpush2.msra.mxu0 0.0
    %109 = vmatprep.subr.mxu0 0.0
    %110 = vmatpush2.msra.mxu0 0.0
    %111 = vmatprep.subr.mxu0 0.0
    %112 = vmatpush2.msra.mxu0 0.0
    %113 = vmatprep.subr.mxu0 0.0
    %114 = vmatpush2.msra.mxu0 0.0
    %115 = vmatprep.subr.mxu0 0.0
    %116 = vmatpush2.msra.mxu0 0.0
    %117 = vmatprep.subr.mxu0 0.0
    %118 = vmatpush2.msra.mxu0 0.0
    %119 = vmatprep.subr.mxu0 0.0
    %120 = vmatpush2.msra.mxu0 0.0
    %121 = vmatprep.subr.mxu0 0.0
    %122 = vmatpush2.msra.mxu0 0.0
    %123 = vmatprep.subr.mxu0 0.0
    %124 = vmatpush2.msra.mxu0 0.0
    %125 = vmatprep.subr.mxu0 0.0
    %126 = vmatpush2.msra.mxu0 0.0
    %127 = vmatprep.subr.mxu0 0.0
    %128 = vmatpush2.msra.mxu0 0.0
    %129 = vmatprep.subr.mxu0 0.0
    %130 = vmatpush2.msra.mxu0 0.0
    %131 = vmatprep.subr.mxu0 0.0
    %132 = vmatpush2.msra.mxu0 0.0
    %133 = vmatprep.subr.mxu0 0.0
    %134 = vmatpush2.msra.mxu0 0.0
    %135 = vmatprep.subr.mxu0 0.0
    %136 = vmatpush2.msra.mxu0 0.0
    %137 = vmatprep.mubr.f32.mxu0 0.0
    %138 = vmatmul.mubr.f32.gmra.mxu0 %v71
    %v139 = vpop.f32.mrf.mxu0
    %v140 = vadd.f32 0.0, %v139
    %v141 = vpop.f32.mrf.mxu0
    %142 = vdwg.mxu0
    %vm143 = vcmask 48128
    %v144 = vsel %vm143, %v140, -inf
    %145 = vmax.xlane.f32.xlu0 %v144
    %v146 = vpop.xlane.xlu0 %145
    %v147 = vsub.f32 %v140, %v146
    %v148 = vmul.f32 %v147, 1.442695
    %v149 = vpow.pop %v148
    %v150 = vsel %vm143, %v149, 0.0
    %151 = vadd.xlane.f32.xlu0 %v150
    %v152 = vpop.xlane.xlu0 %151
    %v153 = vlog2.pop %v152
    %v154 = vmul.f32 %v153, 0.6931472
    %v155 = vadd.f32 %v146, %v154
    %v156 = vmul.f32 %v140, %v56
    %v157 = vsel %vm143, %v156, 0.0
    %158 = vadd.xlane.f32.xlu0 %v157
    %v159 = vpop.xlane.xlu0 %158
    %v160 = vsub.f32 %v155, %v159
    %vm161 = vcmp.eq.f32.partialorder %v140, %v146
    %v162 = vsel %vm161, %v32, 6
    %v163 = vsel %vm143, %v162, 2147483647
    %v164 = vand.u32 %v163, 65535
    %v165 = vshra.s32 %v163, 16
    %v166 = vcvt.s32.f32 %v164
    %v167 = vcvt.s32.f32 %v165
    %168 = vmin.xlane.f32.xlu0 %v167
    %v169 = vpop.xlane.xlu0 %168
    %vm170 = vcmp.eq.f32.partialorder %v167, %v169
    %v171 = vsel %vm170, %v166, inf
    %172 = vmin.xlane.f32.xlu0 %v171
    %v173 = vpop.xlane.xlu0 %172
    %v174 = vcvt.f32.s32 %v173
    %v175 = vcvt.f32.s32 %v169
    %v176 = vshll.u32 %v175, 16
    %v177 = vadd.s32 %v176, %v174
    %vm178 = vcmp.eq.s32.totalorder %v177, %v30
    %v179 = vsel %vm178, 1, 0
    %v180 = vcvt.s32.f32 %v179
    %vm181 = vcmask 89136
    %v182 = vsel %vm181, %v140, -inf
    %183 = vmax.xlane.f32.xlu0 %v182
    %v184 = vpop.xlane.xlu0 %183
    %v185 = vsub.f32 %v140, %v184
    %v186 = vmul.f32 %v185, 1.442695
    %v187 = vpow.pop %v186
    %189 = vrot.lane.b32.xlu0 %v187, 122
    %v190 = vpop.permute.xlu0 %189
    %vm192 = vcmask 39936
    %v193 = vsel %vm192, %v190, 0.0
    %194 = vadd.xlane.f32.xlu0 %v193
    %v195 = vpop.xlane.xlu0 %194
    %v196 = vlog2.pop %v195
    %v197 = vmul.f32 %v196, 0.6931472
    %v198 = vadd.f32 %v184, %v197
    %200 = vrot.lane.b32.xlu0 %v156, 122
    %v201 = vpop.permute.xlu0 %200
    %v203 = vsel %vm192, %v201, 0.0
    %204 = vadd.xlane.f32.xlu0 %v203
    %v205 = vpop.xlane.xlu0 %204
    %v206 = vsub.f32 %v198, %v205
    %vm207 = vcmp.eq.f32.partialorder %v140, %v184
    %208 = vrot.lane.b32.xlu0 %v32, 6
    %v209 = vpop.permute.xlu0 %208
    %v210 = vsel %vm207, %v209, 5
    %v211 = vsel %vm181, %v210, 2147483647
    %v212 = vand.u32 %v211, 65535
    %v213 = vshra.s32 %v211, 16
    %v214 = vcvt.s32.f32 %v212
    %v215 = vcvt.s32.f32 %v213
    %216 = vmin.xlane.f32.xlu0 %v215
    %v217 = vpop.xlane.xlu0 %216
    %vm218 = vcmp.eq.f32.partialorder %v215, %v217
    %v219 = vsel %vm218, %v214, inf
    %220 = vmin.xlane.f32.xlu0 %v219
    %v221 = vpop.xlane.xlu0 %220
    %v222 = vcvt.f32.s32 %v221
    %v223 = vcvt.f32.s32 %v217
    %v224 = vshll.u32 %v223, 16
    %v225 = vadd.s32 %v224, %v222
    %vm226 = vcmp.eq.s32.totalorder %v225, %v30
    %v227 = vsel %vm226, 1, 0
    %v228 = vcvt.s32.f32 %v227
    %v229 = vsub.f32 0.0, %v140
    %v230 = vmul.f32 %v229, 1.442695
    %v231 = vpow.pop %v230
    %v232 = vadd.f32 %v231, 1.0
    %v233 = vrcp.pop %v232
    %v234 = vmul.f32 1.0, %v233
    %v235 = vmul.f32 %v234, -1.0
    %v236 = vadd.f32 %v235, 1.0
    %v237 = vmax.f32 %v140, 0.0
    %v238 = vand.u32 2147483647, %v140
    %v239 = vsub.f32 0.0, %v238
    %v240 = vmul.f32 %v239, 1.442695
    %v241 = vpow.pop %v240
    %v242 = vadd.f32 %v241, 1.0
    %v243 = vlog2.pop %v242
    %v244 = vmul.f32 %v243, 0.6931472
    %v245 = vadd.f32 %v237, %v244
    %v246 = vadd.f32 %v245, 0.0001
    %vm247 = vcmask 212136
    %v248 = vsel %vm247, %v140, -inf
    %249 = vmax.xlane.f32.xlu0 %v248
    %v250 = vpop.xlane.xlu0 %249
    %v251 = vsub.f32 %v140, %v250
    %v252 = vmul.f32 %v251, 1.442695
    %v253 = vpow.pop %v252
    %255 = vrot.lane.b32.xlu0 %v253, 107
    %v256 = vpop.permute.xlu0 %255
    %v258 = vsel %vm192, %v256, 0.0
    %259 = vadd.xlane.f32.xlu0 %v258
    %v260 = vpop.xlane.xlu0 %259
    %v261 = vlog2.pop %v260
    %v262 = vmul.f32 %v261, 0.6931472
    %v263 = vadd.f32 %v250, %v262
    %v264 = vsub.f32 %v140, %v263
    %vm265 = vcmp.lt.s32.totalorder %v32, 5
    %vm266 = vcmp.lt.s32.totalorder %v32, 10
    %268 = vrot.lane.b32.xlu0 %v246, 117
    %v269 = vpop.permute.xlu0 %268
    %272 = vrot.lane.b32.xlu0 %v264, 117
    %v273 = vpop.permute.xlu0 %272
    %v275 = vsel %vm266, %v269, %v273
    %277 = vrot.lane.b32.xlu0 %v236, 117
    %v278 = vpop.permute.xlu0 %277
    %v280 = vsel %vm265, %v278, %v275
    %vm281 = vcmask 335136
    %v282 = vsel %vm281, %v140, -inf
    %283 = vmax.xlane.f32.xlu0 %v282
    %v284 = vpop.xlane.xlu0 %283
    %v285 = vsub.f32 %v140, %v284
    %v286 = vmul.f32 %v285, 1.442695
    %v287 = vpow.pop %v286
    %289 = vrot.lane.b32.xlu0 %v287, 92
    %v290 = vpop.permute.xlu0 %289
    %v292 = vsel %vm192, %v290, 0.0
    %293 = vadd.xlane.f32.xlu0 %v292
    %v294 = vpop.xlane.xlu0 %293
    %v295 = vlog2.pop %v294
    %v296 = vmul.f32 %v295, 0.6931472
    %v297 = vadd.f32 %v284, %v296
    %v298 = vsub.f32 %v140, %v297
    %299 = vrot.lane.b32.xlu0 %v246, 102
    %v300 = vpop.permute.xlu0 %299
    %303 = vrot.lane.b32.xlu0 %v298, 102
    %v304 = vpop.permute.xlu0 %303
    %v306 = vsel %vm266, %v300, %v304
    %307 = vrot.lane.b32.xlu0 %v236, 102
    %v308 = vpop.permute.xlu0 %307
    %v310 = vsel %vm265, %v308, %v306
    %v311 = vsub.f32 %v280, %v49
    %v312 = vsub.f32 0.0, %v311
    %v313 = vmul.f32 %v312, %v311
    %v314 = vmul.f32 %v280, 2.0
    %316 = vrot.lane.b32.xlu0 %v314, 123
    %v317 = vpop.permute.xlu0 %316
    %v319 = vrcp.pop %v317
    %v320 = vmul.f32 %v313, %v319
    %v321 = vlog2.pop %v280
    %v322 = vmul.f32 %v321, 0.6931472
    %v323 = vmul.f32 %v322, 0.5
    %325 = vrot.lane.b32.xlu0 %v323, 123
    %v326 = vpop.permute.xlu0 %325
    %v328 = vsub.f32 %v320, %v326
    %330 = vrot.lane.b32.xlu0 %v280, 118
    %v331 = vpop.permute.xlu0 %330
    %v333 = vadd.f32 %v328, %v331
    %v334 = vsub.f32 %v333, 0.39908993
    %v335 = vsel %vm192, %v334, -inf
    %336 = vmax.xlane.f32.xlu0 %v335
    %v337 = vpop.xlane.xlu0 %336
    %v338 = vsub.f32 %v334, %v337
    %v339 = vmul.f32 %v338, 1.442695
    %v340 = vpow.pop %v339
    %v341 = vsel %vm192, %v340, 0.0
    %342 = vadd.xlane.f32.xlu0 %v341
    %v343 = vpop.xlane.xlu0 %342
    %v344 = vlog2.pop %v343
    %v345 = vmul.f32 %v344, 0.6931472
    %v346 = vadd.f32 %v337, %v345
    %v347 = vsub.f32 0.0, %v346
    %348 = vset.pattern.permute.xlu0 3
    %349 = vperm.xlu0 %348, %v29
    %v350 = vpop.permute.xlu0 %349
    %v352 = vsub.f32 %v310, %v350
    %v353 = vsub.f32 0.0, %v352
    %v354 = vmul.f32 %v353, %v352
    %v355 = vmul.f32 %v310, 2.0
    %357 = vrot.lane.b32.xlu0 %v355, 123
    %v358 = vpop.permute.xlu0 %357
    %v360 = vrcp.pop %v358
    %v361 = vmul.f32 %v354, %v360
    %v362 = vlog2.pop %v310
    %v363 = vmul.f32 %v362, 0.6931472
    %v364 = vmul.f32 %v363, 0.5
    %366 = vrot.lane.b32.xlu0 %v364, 123
    %v367 = vpop.permute.xlu0 %366
    %v369 = vsub.f32 %v361, %v367
    %371 = vrot.lane.b32.xlu0 %v310, 118
    %v372 = vpop.permute.xlu0 %371
    %v374 = vadd.f32 %v369, %v372
    %v375 = vsub.f32 %v374, 0.39908993
    %v376 = vsel %vm192, %v375, -inf
    %377 = vmax.xlane.f32.xlu0 %v376
    %v378 = vpop.xlane.xlu0 %377
    %v379 = vsub.f32 %v375, %v378
    %v380 = vmul.f32 %v379, 1.442695
    %v381 = vpow.pop %v380
    %v382 = vsel %vm192, %v381, 0.0
    %383 = vadd.xlane.f32.xlu0 %v382
    %v384 = vpop.xlane.xlu0 %383
    %v385 = vlog2.pop %v384
    %v386 = vmul.f32 %v385, 0.6931472
    %v387 = vadd.f32 %v378, %v386
    %v388 = vsub.f32 0.0, %v387
    %v389 = vadd.f32 %v160, %v206
    %v390 = vadd.f32 %v347, %v388
    %v391 = vadd.f32 %v389, %v390
    %393 = vrot.lane.b32.xlu0 %v180, 1
    %v394 = vpop.permute.xlu0 %393
    %397 = vrot.lane.b32.xlu0 %v228, 1
    %v398 = vpop.permute.xlu0 %397
    %400 = vrot.lane.b32.xlu0 %v280, 3
    %v401 = vpop.permute.xlu0 %400
    %403 = vrot.lane.b32.xlu0 %v310, 18
    %v404 = vpop.permute.xlu0 %403
    %vm406 = vcmask 7168
    %v407 = vsel %vm406, %v391, %v394
    %vm408 = vcmask 15360
    %v409 = vsel %vm408, %v407, %v398
    %vm410 = vcmask 23552
    %v411 = vsel %vm410, %v409, %v401
    %vm412 = vcmask 146432
    %v413 = vsel %vm412, %v411, %v404
    %vm414 = vcmask 269312
    %v415 = vsel %vm414, %v413, 0.0
    %vm416 = vcmask 523264
    %417 = vst.msk [vmem:[%s3] sm:$0xff] %vm416, %v415
    // Predicated region
    $region18: #{primitive_decoder_forward.1} parent=1 // pred_check
      _
    $region19: #{primitive_decoder_forward.1} parent=1 // pred_check_branch
      %419 = sbr.rel (0) target = $region21
    $region20: #{primitive_decoder_forward.1} parent=1 // pred_region
      _
    $region21: #{primitive_decoder_forward.1} parent=1 // pred_fallthru
      _
    // Predicated region
    $region22: #{primitive_decoder_forward.1} parent=1 // pred_check
      _
    $region23: #{primitive_decoder_forward.1} parent=1 // pred_check_branch
      %421 = sbr.rel (0) target = $region25
    $region24: #{primitive_decoder_forward.1} parent=1 // pred_region
      _
    $region25: #{primitive_decoder_forward.1} parent=1 // pred_fallthru
      _
    %422 = vsyncpa [#allocation3], 1

</llo_original>
